<compile_context>
chip_gen: v7x
topology: tpu7x:2x2x1
jax: 0.10.0
libtpu: 0.0.40
codegen_flags: <defaults>
</compile_context>

<pallas_src>
import jax
import jax.numpy as jnp
from jax.experimental import pallas as pl
from jax.experimental.pallas import tpu as pltpu

_LANE = 128
_SUBLANE = 8
_MAX_LANE = 16384                            # cap on slab lane width (search bound only)
_BLOCK_BYTES_BUDGET = 4 * 1024 * 1024        # per VMEM block; x4 (in/out, double-buffered) ~= 16 MiB
_VMEM_LIMIT_BYTES = 32 * 1024 * 1024         # safe on v5e/v6e (128 MiB) and v7x (64 MiB)


def _flatten_copy_kernel(x_ref, o_ref):
    # Pure copy: Flatten has no arithmetic; this just materializes the view.
    o_ref[...] = x_ref[...]


def _pick_lane_width(total):
    """Largest lane width (multiple of 128, <= _MAX_LANE) dividing `total`
    such that rows = total // lane is a multiple of 8 (full sublane rows)."""
    lane = (min(total, _MAX_LANE) // _LANE) * _LANE
    while lane >= _LANE:
        if total % lane == 0 and (total // lane) % _SUBLANE == 0:
            return lane
        lane -= _LANE
    return None


def _pick_tile_rows(rows, lane, itemsize):
    """Largest multiple-of-8 divisor of `rows` whose (tile_r, lane) block stays
    within the per-block VMEM budget; prefers >= 2 grid steps (v7x megacore)."""
    cap = max(_SUBLANE, _BLOCK_BYTES_BUDGET // (lane * itemsize))
    best = _SUBLANE
    t = _SUBLANE
    limit = min(rows, cap)
    while t <= limit:
        if rows % t == 0:
            best = t
        t += _SUBLANE
    # If the whole slab fits in one block, split it in two so both v7x
    # TensorCores participate (harmless on single-TC v5e/v6e).
    if best == rows and rows % (2 * _SUBLANE) == 0:
        best = rows // 2
    return best


def _copy_2d(x2):
    """Lane/sublane-dense, aliased HBM->HBM copy of a (rows, lane) slab.
    Each tile spans full rows, so every DMA is one contiguous transfer."""
    rows, lane = x2.shape
    itemsize = jnp.dtype(x2.dtype).itemsize
    tile_r = _pick_tile_rows(rows, lane, itemsize)
    grid = (rows // tile_r,)
    spec = pl.BlockSpec((tile_r, lane), lambda i: (i, 0))
    return pl.pallas_call(
        _flatten_copy_kernel,
        grid=grid,
        in_specs=[spec],
        out_specs=spec,
        out_shape=jax.ShapeDtypeStruct((rows, lane), x2.dtype),
        input_output_aliases={0: 0},     # donate input buffer; no 2nd HBM allocation
        compiler_params=pltpu.CompilerParams(
            dimension_semantics=("parallel",),
            vmem_limit_bytes=_VMEM_LIMIT_BYTES,
        ),
    )(x2)


@jax.jit
def flatten(x):
    """Pallas equivalent of Flatten.forward: (N, d1, ..., dk) -> (N, prod(d_i))."""
    n = x.shape[0]
    flat = 1
    for d in x.shape[1:]:
        flat *= d
    total = n * flat

    lane = _pick_lane_width(total)
    if lane is not None:
        # Metadata-only re-view to a lane/sublane-dense slab, then copy.
        y = _copy_2d(x.reshape(total // lane, lane))
        return y.reshape(n, flat)

    # Fallback (total not tileable into full (8,128) blocks): pad up to an
    # aligned size, copy, then strip the padding (reshape/slice are metadata).
    lane = 1024 if total >= 64 * 1024 else _LANE
    block = _SUBLANE * lane
    padded = -(-total // block) * block
    xf = jnp.pad(x.reshape(-1), (0, padded - total))
    y = _copy_2d(xf.reshape(padded // lane, lane))
    return y.reshape(-1)[:total].reshape(n, flat)


if __name__ == "__main__":
    key = jax.random.PRNGKey(0)

    # NCHW feature map consistent with the conv net: (N=2, C=4, H=16, W=16)
    x = jax.random.normal(key, (2, 4, 16, 16), dtype=jnp.float32)
    y = flatten(x)
    jax.block_until_ready(y)
    ref = x.reshape(2, -1)
    assert y.shape == (2, 4 * 16 * 16), y.shape
    assert y.dtype == x.dtype
    assert bool(jnp.array_equal(y, ref)), "mismatch vs reference flatten"

    # Also exercise the padded fallback path (flat dim not a multiple of 128).
    x_odd = jax.random.normal(key, (2, 3, 5, 7), dtype=jnp.float32)
    y_odd = flatten(x_odd)
    jax.block_until_ready(y_odd)
    assert y_odd.shape == (2, 3 * 5 * 7), y_odd.shape
    assert bool(jnp.array_equal(y_odd, x_odd.reshape(2, -1))), "mismatch (padded path)"

    print("KERNEL_OK")
</pallas_src>

<mosaic_0001>
module attributes {stable_mosaic.version = 11 : i64} {
  func.func @_flatten_copy_kernel(%arg0: i32, %arg1: memref<8x256xf32, #tpu.memory_space<vmem>>, %arg2: memref<8x256xf32, #tpu.memory_space<vmem>>) attributes {dimension_semantics = [#tpu.dimension_semantics<parallel>], iteration_bounds = array<i64: 1>, scalar_prefetch = 0 : i64, scratch_operands = 0 : i64, tpu.core_type = #tpu.core_type<tc>, window_params = [{transform_indices = @transform_0, window_bounds = array<i64: 8, 256>}, {transform_indices = @transform_1, window_bounds = array<i64: 8, 256>}]} {
    %c0 = arith.constant 0 : index
    %c0_0 = arith.constant 0 : index
    %0 = vector.load %arg1[%c0, %c0_0] : memref<8x256xf32, #tpu.memory_space<vmem>>, vector<8x256xf32>
    %c0_1 = arith.constant 0 : index
    %c0_2 = arith.constant 0 : index
    %1 = vector.load %arg2[%c0_1, %c0_2] : memref<8x256xf32, #tpu.memory_space<vmem>>, vector<8x256xf32>
    tpu.vector_store %arg2[%c0_1, %c0_2], %0 {strides = array<i32>} : memref<8x256xf32, #tpu.memory_space<vmem>>, vector<8x256xf32>,
    return
  }
  func.func @transform_0(%arg0: i32) -> (i32, i32) {
    %c0_i32 = arith.constant 0 : i32
    %c0_i32_0 = arith.constant 0 : i32
    return %arg0, %c0_i32 : i32, i32
  }
  func.func @transform_1(%arg0: i32) -> (i32, i32) {
    %c0_i32 = arith.constant 0 : i32
    %c0_i32_0 = arith.constant 0 : i32
    return %arg0, %c0_i32 : i32, i32
  }
}

</mosaic_0001>

<llo_original>
// kernel: flatten.1
$region0: #{flatten.1}
  #allocation0 [shape = 'u32[]', space=smem, size = 0x4, offset = 0x4, fixed_abs, tag = 'smem constant byte address 0x4 - core index']
  #allocation1 [shape = 'u32[144,128]{1,0:T(1,128)}', space=vmem, size = 0x12000, scoped, tag = 'internal scratch']
  %s0 = inlined_call_operand.vmem [shape: f32[8,256], index: 0, kind: input, shape index: {}, may-alias: {0,1}]
  %s1 = inlined_call_operand.vmem [shape: f32[8,256], index: 1, kind: output, shape index: {}, may-alias: {0,1}]
  %s2 = sld [smem:[#allocation0]]
  $region14: #{flatten.1} parent=0
    _
  %s4 = ssub.s32 1, %s2
  %s5 = scalar_select 0, %s4, %s2
  // Predicated region
  $region2: #{flatten.1} parent=0 // pred_check
    _
  $region3: #{flatten.1} parent=0 // pred_check_branch
    %7 = sbr.rel (0) target = $region5
  $region4: #{flatten.1} parent=0 // pred_region
    _
  $region5: #{flatten.1} parent=0 // pred_fallthru
    _
  %v8 = vld [vmem:[%s0] sm:$0xff]
  %v9 = vld [vmem:[%s0 + $0x8] sm:$0xff]
  %10 = vst [vmem:[%s1] sm:$0xff] %v8
  %11 = vst [vmem:[%s1 + $0x8] sm:$0xff] %v9
  // Predicated region
  $region6: #{flatten.1} parent=0 // pred_check
    _
  $region7: #{flatten.1} parent=0 // pred_check_branch
    %13 = sbr.rel (0) target = $region9
  $region8: #{flatten.1} parent=0 // pred_region
    _
  $region9: #{flatten.1} parent=0 // pred_fallthru
    _
  // Predicated region
  $region10: #{flatten.1} parent=0 // pred_check
    _
  $region11: #{flatten.1} parent=0 // pred_check_branch
    %15 = sbr.rel (0) target = $region13
  $region12: #{flatten.1} parent=0 // pred_region
    _
  $region13: #{flatten.1} parent=0 // pred_fallthru
    _

</llo_original>
